<compile_context>
chip_gen: v5e
topology: v5e:2x2
jax: 0.10.0
libtpu: 0.0.40
codegen_flags: <defaults>
</compile_context>

<pallas_src>
import jax
import jax.numpy as jnp
from jax.experimental import pallas as pl
from jax.experimental.pallas import tpu as pltpu

_LANE = 128
_SUBLANE = 8


def _make_sdf_loss_kernel(sdf_scale: float):
    sdf_scale = float(sdf_scale)

    def kernel(pred_ref, tgt_ref, sq_ref, cnt_ref):
        i = pl.program_id(1)

        @pl.when(i == 0)
        def _():
            sq_ref[...] = jnp.zeros_like(sq_ref)
            cnt_ref[...] = jnp.zeros_like(cnt_ref)

        o = pred_ref[...].astype(jnp.float32)
        t = tgt_ref[...].astype(jnp.float32)

        # Single residual; the real-valued loss is derived from it in the
        # wrapper as sum(d^2) / sdf_scale^2.
        d = t * sdf_scale - o
        sq = (d * d).reshape(-1, _SUBLANE, _LANE)
        sq_ref[...] += jnp.sum(sq, axis=0)          # cross-vreg VPU adds only

        eq = (t > 0.5) == (o > 0.5)
        cnt = eq.astype(jnp.float32).reshape(-1, _SUBLANE, _LANE)
        cnt_ref[...] += jnp.sum(cnt, axis=0)

    return kernel


def sdf_loss_pallas(outputs, targets, sdf_scale, *, tm=2048, num_cores=2):
    """Pallas implementation of SDFLoss.forward.

    outputs, targets: same shape; the last dim is the `.sum(-1)` dim.
    Returns dict of scalar float32 values matching the PyTorch module.
    """
    assert outputs.shape == targets.shape
    sdf_scale = float(sdf_scale)

    D = outputs.shape[-1]
    N = int(outputs.size)          # total element count
    R = N // D                     # rows reduced by .sum(-1) in sdf_loss

    # Lane-dense flattened view, padded to (num_cores * steps * tm_eff) rows.
    rows = -(-N // _LANE)
    per_core_rows = -(-rows // num_cores)
    tm_eff = max(_SUBLANE, min(int(tm), ((per_core_rows + 7) // 8) * 8))
    steps = -(-rows // (num_cores * tm_eff))
    rows_padded = num_cores * steps * tm_eff
    pad = rows_padded * _LANE - N

    o_flat = outputs.reshape(-1)
    t_flat = targets.reshape(-1)
    if pad:
        o_flat = jnp.pad(o_flat, (0, pad))
        t_flat = jnp.pad(t_flat, (0, pad))
    o2 = o_flat.reshape(rows_padded, _LANE)
    t2 = t_flat.reshape(rows_padded, _LANE)

    kernel = _make_sdf_loss_kernel(sdf_scale)

    acc_shape = jax.ShapeDtypeStruct((num_cores * _SUBLANE, _LANE), jnp.float32)
    in_spec = pl.BlockSpec((tm_eff, _LANE), lambda c, i: (c * steps + i, 0))
    acc_spec = pl.BlockSpec((_SUBLANE, _LANE), lambda c, i: (c, 0))

    out_sq, out_cnt = pl.pallas_call(
        kernel,
        out_shape=(acc_shape, acc_shape),
        grid_spec=pltpu.PrefetchScalarGridSpec(
            num_scalar_prefetch=0,
            grid=(num_cores, steps),
            in_specs=[in_spec, in_spec],
            out_specs=(acc_spec, acc_spec),
        ),
        compiler_params=pltpu.CompilerParams(
            dimension_semantics=("parallel", "arbitrary")),
    )(o2, t2)

    # Zero pads contribute 0 to the squared sum; they do count as sign matches
    # (0 > 0.5 on both sides), so subtract the known pad count.
    s_sq = jnp.sum(out_sq)
    s_cnt = jnp.sum(out_cnt) - jnp.float32(pad)

    # torch.mean(((t*scale - o)**2).sum(-1))        -> total_sq / num_rows
    sdf_loss = s_sq / jnp.float32(R)
    # torch.mean((t - o/scale)**2) * 10000
    #   == total_sq / scale^2 / N * 10000 (algebraic identity)
    sdf_loss_realvalue = (s_sq / jnp.float32(sdf_scale * sdf_scale)
                          / jnp.float32(N) * jnp.float32(10000.0))
    # torch.mean((t>0.5)==(o>0.5) as float)         -> match_count / N
    accuracy = s_cnt / jnp.float32(N)

    return {
        'sdf_loss': sdf_loss,
        'ignore_sdf_loss_realvalue': sdf_loss_realvalue,
        'ignore_sdf_accuracy': accuracy,
    }


def sdf_loss_ref(outputs, targets, sdf_scale):
    """Pure-JAX reference mirroring the PyTorch forward."""
    sdf_loss = jnp.mean(((targets * sdf_scale - outputs) ** 2).sum(-1))
    sdf_loss_realvalue = jnp.mean((targets - outputs / sdf_scale) ** 2) * 10000
    gt_sign = targets > 0.5
    pred_sign = outputs > 0.5
    accuracy = jnp.mean((gt_sign == pred_sign).astype(jnp.float32))
    return {
        'sdf_loss': sdf_loss,
        'ignore_sdf_loss_realvalue': sdf_loss_realvalue,
        'ignore_sdf_accuracy': accuracy,
    }


def _check(result, ref):
    for k in result:
        assert jnp.allclose(result[k], ref[k], rtol=1e-5, atol=1e-5), (
            k, result[k], ref[k])


if __name__ == "__main__":
    # Module __init__ only stores scalars (sdf_scale); pick it deterministically.
    sdf_scale = 100.0

    key = jax.random.PRNGKey(0)
    k1, k2, k3, k4 = jax.random.split(key, 4)

    # Small shape consistent with the module forward (padding path exercised).
    B, S, D = 2, 8, 32
    outputs = jax.random.normal(k1, (B, S, D), dtype=jnp.float32)
    targets = jax.random.normal(k2, (B, S, D), dtype=jnp.float32) * 0.01

    result = sdf_loss_pallas(outputs, targets, sdf_scale)
    result = jax.tree_util.tree_map(jax.block_until_ready, result)
    _check(result, sdf_loss_ref(outputs, targets, sdf_scale))

    # Second small case with a tiny tile to exercise the multi-step
    # accumulation (grid steps > 1) with no padding.
    o2 = jax.random.normal(k3, (2, 64, 32), dtype=jnp.float32)
    t2 = jax.random.normal(k4, (2, 64, 32), dtype=jnp.float32) * 0.01
    result2 = sdf_loss_pallas(o2, t2, sdf_scale, tm=8)
    result2 = jax.tree_util.tree_map(jax.block_until_ready, result2)
    _check(result2, sdf_loss_ref(o2, t2, sdf_scale))

    print("KERNEL_OK")
</pallas_src>

<mosaic_0001>
module attributes {stable_mosaic.version = 11 : i64} {
  func.func @kernel(%arg0: i32, %arg1: i32, %arg2: memref<8x128xf32, #tpu.memory_space<vmem>>, %arg3: memref<8x128xf32, #tpu.memory_space<vmem>>, %arg4: memref<8x128xf32, #tpu.memory_space<vmem>>, %arg5: memref<8x128xf32, #tpu.memory_space<vmem>>) attributes {dimension_semantics = [#tpu.dimension_semantics<parallel>, #tpu.dimension_semantics<arbitrary>], iteration_bounds = array<i64: 2, 1>, scalar_prefetch = 0 : i64, scratch_operands = 0 : i64, tpu.core_type = #tpu.core_type<tc>, window_params = [{transform_indices = @transform_0, window_bounds = array<i64: 8, 128>}, {transform_indices = @transform_1, window_bounds = array<i64: 8, 128>}, {transform_indices = @transform_2, window_bounds = array<i64: 8, 128>}, {transform_indices = @transform_3, window_bounds = array<i64: 8, 128>}]} {
    %c0_i32 = arith.constant 0 : i32
    %0 = arith.cmpi eq, %arg1, %c0_i32 : i32
    %1 = arith.extui %0 : i1 to i32
    %c0_i32_0 = arith.constant 0 : i32
    %2 = arith.cmpi ne, %1, %c0_i32_0 : i32
    scf.if %2 {
      %cst_17 = arith.constant 0.000000e+00 : f32
      %27 = vector.broadcast %cst_17 : f32 to vector<8x128xf32>
      %c0_18 = arith.constant 0 : index
      %c0_19 = arith.constant 0 : index
      %28 = vector.load %arg4[%c0_18, %c0_19] : memref<8x128xf32, #tpu.memory_space<vmem>>, vector<8x128xf32>
      tpu.vector_store %arg4[%c0_18, %c0_19], %27 {strides = array<i32>} : memref<8x128xf32, #tpu.memory_space<vmem>>, vector<8x128xf32>,
      %cst_20 = arith.constant 0.000000e+00 : f32
      %29 = vector.broadcast %cst_20 : f32 to vector<8x128xf32>
      %c0_21 = arith.constant 0 : index
      %c0_22 = arith.constant 0 : index
      %30 = vector.load %arg5[%c0_21, %c0_22] : memref<8x128xf32, #tpu.memory_space<vmem>>, vector<8x128xf32>
      tpu.vector_store %arg5[%c0_21, %c0_22], %29 {strides = array<i32>} : memref<8x128xf32, #tpu.memory_space<vmem>>, vector<8x128xf32>,
    } else {
    }
    %c0 = arith.constant 0 : index
    %c0_1 = arith.constant 0 : index
    %3 = vector.load %arg2[%c0, %c0_1] : memref<8x128xf32, #tpu.memory_space<vmem>>, vector<8x128xf32>
    %c0_2 = arith.constant 0 : index
    %c0_3 = arith.constant 0 : index
    %4 = vector.load %arg3[%c0_2, %c0_3] : memref<8x128xf32, #tpu.memory_space<vmem>>, vector<8x128xf32>
    %cst = arith.constant 1.000000e+02 : f32
    %5 = vector.broadcast %cst : f32 to vector<8x128xf32>
    %6 = arith.mulf %4, %5 : vector<8x128xf32>
    %7 = arith.subf %6, %3 : vector<8x128xf32>
    %8 = arith.mulf %7, %7 : vector<8x128xf32>
    %9 = vector.shape_cast %8 : vector<8x128xf32> to vector<1x8x128xf32>
    %c0_4 = arith.constant 0 : index
    %c0_5 = arith.constant 0 : index
    %10 = vector.load %arg4[%c0_4, %c0_5] : memref<8x128xf32, #tpu.memory_space<vmem>>, vector<8x128xf32>
    %cst_6 = arith.constant dense<0.000000e+00> : vector<8x128xf32>
    %11 = vector.multi_reduction <add>, %9, %cst_6 [0] : vector<1x8x128xf32> to vector<8x128xf32>
    %12 = arith.addf %10, %11 : vector<8x128xf32>
    %c0_7 = arith.constant 0 : index
    %c0_8 = arith.constant 0 : index
    %13 = vector.load %arg4[%c0_7, %c0_8] : memref<8x128xf32, #tpu.memory_space<vmem>>, vector<8x128xf32>
    tpu.vector_store %arg4[%c0_7, %c0_8], %12 {strides = array<i32>} : memref<8x128xf32, #tpu.memory_space<vmem>>, vector<8x128xf32>,
    %cst_9 = arith.constant 5.000000e-01 : f32
    %14 = vector.broadcast %cst_9 : f32 to vector<8x128xf32>
    %15 = arith.cmpf ogt, %4, %14 : vector<8x128xf32>
    %cst_10 = arith.constant 5.000000e-01 : f32
    %16 = vector.broadcast %cst_10 : f32 to vector<8x128xf32>
    %17 = arith.cmpf ogt, %3, %16 : vector<8x128xf32>
    %18 = arith.xori %15, %17 : vector<8x128xi1>
    %cst_11 = arith.constant dense<true> : vector<8x128xi1>
    %19 = arith.xori %18, %cst_11 : vector<8x128xi1>
    %20 = arith.extui %19 : vector<8x128xi1> to vector<8x128xi32>
    %21 = arith.sitofp %20 : vector<8x128xi32> to vector<8x128xf32>
    %22 = vector.shape_cast %21 : vector<8x128xf32> to vector<1x8x128xf32>
    %c0_12 = arith.constant 0 : index
    %c0_13 = arith.constant 0 : index
    %23 = vector.load %arg5[%c0_12, %c0_13] : memref<8x128xf32, #tpu.memory_space<vmem>>, vector<8x128xf32>
    %cst_14 = arith.constant dense<0.000000e+00> : vector<8x128xf32>
    %24 = vector.multi_reduction <add>, %22, %cst_14 [0] : vector<1x8x128xf32> to vector<8x128xf32>
    %25 = arith.addf %23, %24 : vector<8x128xf32>
    %c0_15 = arith.constant 0 : index
    %c0_16 = arith.constant 0 : index
    %26 = vector.load %arg5[%c0_15, %c0_16] : memref<8x128xf32, #tpu.memory_space<vmem>>, vector<8x128xf32>
    tpu.vector_store %arg5[%c0_15, %c0_16], %25 {strides = array<i32>} : memref<8x128xf32, #tpu.memory_space<vmem>>, vector<8x128xf32>,
    return
  }
  func.func @transform_0(%arg0: i32, %arg1: i32) -> (i32, i32) {
    %c1_i32 = arith.constant 1 : i32
    %0 = arith.muli %arg0, %c1_i32 : i32
    %1 = arith.addi %0, %arg1 : i32
    %c0_i32 = arith.constant 0 : i32
    %c0_i32_0 = arith.constant 0 : i32
    return %1, %c0_i32 : i32, i32
  }
  func.func @transform_1(%arg0: i32, %arg1: i32) -> (i32, i32) {
    %c1_i32 = arith.constant 1 : i32
    %0 = arith.muli %arg0, %c1_i32 : i32
    %1 = arith.addi %0, %arg1 : i32
    %c0_i32 = arith.constant 0 : i32
    %c0_i32_0 = arith.constant 0 : i32
    return %1, %c0_i32 : i32, i32
  }
  func.func @transform_2(%arg0: i32, %arg1: i32) -> (i32, i32) {
    %c0_i32 = arith.constant 0 : i32
    %c0_i32_0 = arith.constant 0 : i32
    return %arg0, %c0_i32 : i32, i32
  }
  func.func @transform_3(%arg0: i32, %arg1: i32) -> (i32, i32) {
    %c0_i32 = arith.constant 0 : i32
    %c0_i32_0 = arith.constant 0 : i32
    return %arg0, %c0_i32 : i32, i32
  }
}

</mosaic_0001>

<llo_original>
// kernel: tpu_custom_call.1
$region0: #{tpu_custom_call.1}
  #allocation0 [shape = 'u32[]', space=smem, size = 0x4, offset = 0x4, fixed_abs, tag = 'smem constant byte address 0x4 - core index']
  #allocation1 [shape = 'u32[72,128]{1,0:T(1,128)}', space=vmem, size = 0x9000, scoped, tag = 'internal scratch']
  %s0 = inlined_call_operand.hbm [shape: f32[16,128], index: 0, kind: input, shape index: {}]
  %s1 = inlined_call_operand.hbm [shape: f32[16,128], index: 1, kind: input, shape index: {}]
  %s2 = inlined_call_operand.hbm [shape: f32[16,128], index: 2, kind: output, shape index: {0}]
  %s3 = inlined_call_operand.hbm [shape: f32[16,128], index: 3, kind: output, shape index: {1}]
  %4 = xla_tuple %s2, %s3
  %s5 = sld [smem:[#allocation0]]
  $region61: #{tpu_custom_call.1} parent=0
    _
  %s7 = ssub.s32 1, %s5
  %s8 = scalar_select 0, %s7, %s5
  $region1: #{tpu_custom_call.1} parent=0
    #allocation2 [shape = 'u8[8192]{0}', space=vmem, size = 0x2000, scoped, tag = 'input window, operand 0']
    #allocation3 [shape = 's32[2]{0}', space=sflag, size = 0x8, scoped, tag = 'scoped memory for tpu_custom_call.1']
    #allocation4 [shape = 's32[2]{0}', space=sflag, size = 0x8, scoped, tag = 'scoped memory for tpu_custom_call.1']
    #allocation5 [shape = 'u8[8192]{0}', space=vmem, size = 0x2000, scoped, tag = 'input window, operand 1']
    #allocation6 [shape = 's32[2]{0}', space=sflag, size = 0x8, scoped, tag = 'scoped memory for tpu_custom_call.1']
    #allocation7 [shape = 'u8[8192]{0}', space=vmem, size = 0x2000, scoped, tag = 'output window, operand 0']
    #allocation8 [shape = 'u8[8192]{0}', space=vmem, size = 0x2000, scoped, tag = 'output window, operand 1']
    #allocation9 [shape = 's32[2]{0}', space=sflag, size = 0x8, scoped, tag = 'scoped memory for tpu_custom_call.1']
    %9 = vsyncpa [#allocation3], 0
    %s10 = scalar_lea.sflag [#allocation3], 1
    %11 = vsyncpa %s10, 0
    %12 = vsyncpa [#allocation6], 0
    %s13 = scalar_lea.sflag [#allocation6], 1
    %14 = vsyncpa %s13, 0
    %15 = vsyncpa [#allocation4], 0
    %s16 = scalar_lea.sflag [#allocation4], 1
    %17 = vsyncpa %s16, 0
    %18 = vsyncpa [#allocation9], 0
    %s19 = scalar_lea.sflag [#allocation9], 1
    %20 = vsyncpa %s19, 0
    loop: start=0, step=1, limit=4
    $region2: #{tpu_custom_call.1} parent=1 // loop_pre_header
      _
    $region3: #{tpu_custom_call.1} parent=1 // loop_header
      %s22 = sphi 0, %s26
      %p23 = scmp.ge.s32.totalorder %s22, 4
      %s29 = sphi 0, %s41
      %s30 = sphi 0, %s37
      %s31 = sphi 0, %s29
      %s32 = sphi 0, %s30
      %s33 = sphi 0, %s31
      %s34 = sphi 0, %s32
      %s46 = sphi 0, %s48
      %s49 = sphi 0, %s46
      %s50 = sphi 0, %s49
      %s66 = sphi 0, %s50
      %s74 = sphi 0, %s76
      %s77 = sphi 0, %s74
      %s78 = sphi 0, %s77
      %s94 = sphi 0, %s78
      %s100 = sphi 0, %s102
      %s103 = sphi 0, %s100
      %s104 = sphi 0, %s103
      %s120 = sphi 0, %s104
      %s126 = sphi 0, %s128
      %s129 = sphi 0, %s126
      %s130 = sphi 0, %s129
      %s146 = sphi 0, %s130
    $region4: #{tpu_custom_call.1} parent=1 // loop_header_branch
      %25 = sbr.rel (%p23) target = $region8
    $region5: #{tpu_custom_call.1} parent=1 // loop_body
      %s27 = ssub.s32 %s22, 1
      %s28 = ssub.s32 %s22, 2
      %s35 = sadd.s32 1, %s30
      %p36 = scmp.ge.s32.totalorder %s35, 1
      %s37 = scalar_select %p36, 0, %s35
      %s38 = sadd.s32 1, %s29
      %s39 = scalar_select %p36, %s38, %s29
      %p40 = scmp.ge.s32.totalorder %s39, 2
      %s41 = scalar_select %p40, 0, %s39
      %s42 = sadd.s32 %s29, %s30
      %s43 = sadd.s32 %s41, %s37
      %s44 = ssub.s32 %s42, %s43
      %p45 = scmp.eq.s32.totalorder %s44, 0
      %s47 = sadd.s32 %s46, 1
      %s48 = scalar_select %p45, %s46, %s47
      %p51 = pneg %p45
      %p52 = scmp.eq.s32.totalorder %s22, 1
      %p53 = por %p51, %p52
      %p54 = scmp.ne.s32.totalorder %s46, %s49
      %p55 = scmp.eq.s32.totalorder %s22, 0
      %p56 = por %p54, %p55
      %p57 = scmp.ne.s32.totalorder %s46, %s49
      %p58 = scmp.eq.s32.totalorder %s27, 1
      %p59 = por %p57, %p58
      %p60 = scmp.ne.s32.totalorder %s49, %s50
      %p61 = scmp.eq.s32.totalorder %s27, 0
      %p62 = por %p60, %p61
      %p63 = scmp.ne.s32.totalorder %s49, %s50
      %p64 = scmp.eq.s32.totalorder %s28, 1
      %p65 = por %p63, %p64
      %p67 = scmp.ne.s32.totalorder %s50, %s66
      %p68 = scmp.eq.s32.totalorder %s28, 0
      %p69 = por %p67, %p68
      %s70 = sadd.s32 %s29, %s30
      %s71 = sadd.s32 %s41, %s37
      %s72 = ssub.s32 %s70, %s71
      %p73 = scmp.eq.s32.totalorder %s72, 0
      %s75 = sadd.s32 %s74, 1
      %s76 = scalar_select %p73, %s74, %s75
      %p79 = pneg %p73
      %p80 = scmp.eq.s32.totalorder %s22, 1
      %p81 = por %p79, %p80
      %p82 = scmp.ne.s32.totalorder %s74, %s77
      %p83 = scmp.eq.s32.totalorder %s22, 0
      %p84 = por %p82, %p83
      %p85 = scmp.ne.s32.totalorder %s74, %s77
      %p86 = scmp.eq.s32.totalorder %s27, 1
      %p87 = por %p85, %p86
      %p88 = scmp.ne.s32.totalorder %s77, %s78
      %p89 = scmp.eq.s32.totalorder %s27, 0
      %p90 = por %p88, %p89
      %p91 = scmp.ne.s32.totalorder %s77, %s78
      %p92 = scmp.eq.s32.totalorder %s28, 1
      %p93 = por %p91, %p92
      %p95 = scmp.ne.s32.totalorder %s78, %s94
      %p96 = scmp.eq.s32.totalorder %s28, 0
      %p97 = por %p95, %p96
      %s98 = ssub.s32 %s29, %s41
      %p99 = scmp.eq.s32.totalorder %s98, 0
      %s101 = sadd.s32 %s100, 1
      %s102 = scalar_select %p99, %s100, %s101
      %p105 = pneg %p99
      %p106 = scmp.eq.s32.totalorder %s22, 1
      %p107 = por %p105, %p106
      %p108 = scmp.ne.s32.totalorder %s100, %s103
      %p109 = scmp.eq.s32.totalorder %s22, 0
      %p110 = por %p108, %p109
      %p111 = scmp.ne.s32.totalorder %s100, %s103
      %p112 = scmp.eq.s32.totalorder %s27, 1
      %p113 = por %p111, %p112
      %p114 = scmp.ne.s32.totalorder %s103, %s104
      %p115 = scmp.eq.s32.totalorder %s27, 0
      %p116 = por %p114, %p115
      %p117 = scmp.ne.s32.totalorder %s103, %s104
      %p118 = scmp.eq.s32.totalorder %s28, 1
      %p119 = por %p117, %p118
      %p121 = scmp.ne.s32.totalorder %s104, %s120
      %p122 = scmp.eq.s32.totalorder %s28, 0
      %p123 = por %p121, %p122
      %s124 = ssub.s32 %s29, %s41
      %p125 = scmp.eq.s32.totalorder %s124, 0
      %s127 = sadd.s32 %s126, 1
      %s128 = scalar_select %p125, %s126, %s127
      %p131 = pneg %p125
      %p132 = scmp.eq.s32.totalorder %s22, 1
      %p133 = por %p131, %p132
      %p134 = scmp.ne.s32.totalorder %s126, %s129
      %p135 = scmp.eq.s32.totalorder %s22, 0
      %p136 = por %p134, %p135
      %p137 = scmp.ne.s32.totalorder %s126, %s129
      %p138 = scmp.eq.s32.totalorder %s27, 1
      %p139 = por %p137, %p138
      %p140 = scmp.ne.s32.totalorder %s129, %s130
      %p141 = scmp.eq.s32.totalorder %s27, 0
      %p142 = por %p140, %p141
      %p143 = scmp.ne.s32.totalorder %s129, %s130
      %p144 = scmp.eq.s32.totalorder %s28, 1
      %p145 = por %p143, %p144
      %p147 = scmp.ne.s32.totalorder %s130, %s146
      %p148 = scmp.eq.s32.totalorder %s28, 0
      %p149 = por %p147, %p148
      %p150 = scmp.le.s32.totalorder 1, %s22
      %p151 = scmp.lt.s32.totalorder %s22, 3
      %p152 = pnand %p150, %p151
      %p153 = pneg %p152
      // Predicated region
      $region9: #{tpu_custom_call.1} parent=5 // pred_check
        _
      $region10: #{tpu_custom_call.1} parent=5 // pred_check_branch
        %155 = sbr.rel (%p152) target = $region12
      $region11: #{tpu_custom_call.1} parent=5 // pred_region
        %s156 = ssub.s32 %s22, 1
      $region12: #{tpu_custom_call.1} parent=5 // pred_fallthru
        _
      %p157 = scmp.lt.s32.totalorder %s22, 2
      // Predicated region
      $region13: #{tpu_custom_call.1} parent=5 // pred_check
        %p158 = pneg %p157
      $region14: #{tpu_custom_call.1} parent=5 // pred_check_branch
        %160 = sbr.rel (%p158) target = $region16
      $region15: #{tpu_custom_call.1} parent=5 // pred_region
        // Predicated region
        $region17: #{tpu_custom_call.1} parent=15 // pred_check
          %p161 = pneg %p56
        $region18: #{tpu_custom_call.1} parent=15 // pred_check_branch
          %163 = sbr.rel (%p161) target = $region20
        $region19: #{tpu_custom_call.1} parent=15 // pred_region
          %s164 = sand.u32 %s46, 1
          %s165 = scalar_lea.sflag [#allocation3], %s164
          %s166 = sand.u32 %s46, 1
          %s167 = smul.addr %s166, 8
          %s168 = scalar_lea.vmem [#allocation2], %s167
          %s169 = sadd.s32 %s29, %s30
          %171 = vsyncadd %s165, 0
          %s172 = smul.addr %s169, 8
          %s173 = scalar_lea.hbm %s0, %s172
          %s175 = sshll.u32 %s173, 4
          %s176 = int_to_ptr.hbm [resolvable:$true] %s175
          %s177 = sshll.u32 %s168, 4
          %s178 = int_to_ptr.vmem [resolvable:$true] %s177
          %180 = dma.hbm_to_vmem [thread:$0]  %s176, 128, %s178, %s165
        $region20: #{tpu_custom_call.1} parent=15 // pred_fallthru
          _
        // Predicated region
        $region21: #{tpu_custom_call.1} parent=15 // pred_check
          %p181 = pneg %p84
        $region22: #{tpu_custom_call.1} parent=15 // pred_check_branch
          %183 = sbr.rel (%p181) target = $region24
        $region23: #{tpu_custom_call.1} parent=15 // pred_region
          %s184 = sand.u32 %s74, 1
          %s185 = scalar_lea.sflag [#allocation6], %s184
          %s186 = sand.u32 %s74, 1
          %s187 = smul.addr %s186, 8
          %s188 = scalar_lea.vmem [#allocation5], %s187
          %s189 = sadd.s32 %s29, %s30
          %191 = vsyncadd %s185, 0
          %s192 = smul.addr %s189, 8
          %s193 = scalar_lea.hbm %s1, %s192
          %s195 = sshll.u32 %s193, 4
          %s196 = int_to_ptr.hbm [resolvable:$true] %s195
          %s197 = sshll.u32 %s188, 4
          %s198 = int_to_ptr.vmem [resolvable:$true] %s197
          %200 = dma.hbm_to_vmem [thread:$0]  %s196, 128, %s198, %s185
        $region24: #{tpu_custom_call.1} parent=15 // pred_fallthru
          _
      $region16: #{tpu_custom_call.1} parent=5 // pred_fallthru
        _
      %p201 = scmp.le.s32.totalorder 1, %s22
      %p202 = scmp.lt.s32.totalorder %s22, 3
      %p203 = pnand %p201, %p202
      %p204 = pneg %p203
      // Predicated region
      $region25: #{tpu_custom_call.1} parent=5 // pred_check
        _
      $region26: #{tpu_custom_call.1} parent=5 // pred_check_branch
        %206 = sbr.rel (%p203) target = $region28
      $region27: #{tpu_custom_call.1} parent=5 // pred_region
        %s207 = ssub.s32 %s22, 1
        %s208 = sand.u32 %s49, 1
        %s209 = scalar_lea.sflag [#allocation3], %s208
        %s210 = sand.u32 %s49, 1
        %s211 = smul.addr %s210, 8
        %s212 = scalar_lea.vmem [#allocation2], %s211
        // Predicated region
        $region29: #{tpu_custom_call.1} parent=27 // pred_check
          %p213 = pneg %p62
        $region30: #{tpu_custom_call.1} parent=27 // pred_check_branch
          %215 = sbr.rel (%p213) target = $region32
        $region31: #{tpu_custom_call.1} parent=27 // pred_region
          %217 = dma.done %s209, 128
        $region32: #{tpu_custom_call.1} parent=27 // pred_fallthru
          _
        %s218 = sand.u32 %s77, 1
        %s219 = scalar_lea.sflag [#allocation6], %s218
        %s220 = sand.u32 %s77, 1
        %s221 = smul.addr %s220, 8
        %s222 = scalar_lea.vmem [#allocation5], %s221
        // Predicated region
        $region33: #{tpu_custom_call.1} parent=27 // pred_check
          %p223 = pneg %p90
        $region34: #{tpu_custom_call.1} parent=27 // pred_check_branch
          %225 = sbr.rel (%p223) target = $region36
        $region35: #{tpu_custom_call.1} parent=27 // pred_region
          %227 = dma.done %s219, 128
        $region36: #{tpu_custom_call.1} parent=27 // pred_fallthru
          _
        %s228 = sand.u32 %s49, 1
        %s229 = scalar_lea.sflag [#allocation3], %s228
        %s230 = sand.u32 %s49, 1
        %s231 = smul.addr %s230, 8
        %s232 = scalar_lea.vmem [#allocation2], %s231
        %p233 = pneg %p62
        %p234 = pneg %p59
        %s235 = sand.u32 %s77, 1
        %s236 = scalar_lea.sflag [#allocation6], %s235
        %s237 = sand.u32 %s77, 1
        %s238 = smul.addr %s237, 8
        %s239 = scalar_lea.vmem [#allocation5], %s238
        %p240 = pneg %p90
        %p241 = pneg %p87
        %p242 = pneg %p116
        %p243 = pneg %p113
        %s244 = sand.u32 %s103, 1
        %s245 = scalar_lea.sflag [#allocation4], %s244
        %s246 = sand.u32 %s103, 1
        %s247 = smul.addr %s246, 8
        %s248 = scalar_lea.vmem [#allocation7], %s247
        %p249 = pneg %p142
        %p250 = pneg %p139
        %s251 = sand.u32 %s129, 1
        %s252 = scalar_lea.sflag [#allocation9], %s251
        %s253 = sand.u32 %s129, 1
        %s254 = smul.addr %s253, 8
        %s255 = scalar_lea.vmem [#allocation8], %s254
        %s256 = sadd.s32 %s31, %s32
        %s257 = sadd.s32 %s31, %s32
        %p258 = scmp.eq.s32.totalorder %s32, 0
        // Predicated region
        $region37: #{tpu_custom_call.1} parent=27 // pred_check
          %p259 = pneg %p258
        $region38: #{tpu_custom_call.1} parent=27 // pred_check_branch
          %261 = sbr.rel (%p259) target = $region40
        $region39: #{tpu_custom_call.1} parent=27 // pred_region
          %262 = vst [vmem:[%s248] sm:$0xff] 0.0
          %263 = vst [vmem:[%s255] sm:$0xff] 0.0
        $region40: #{tpu_custom_call.1} parent=27 // pred_fallthru
          _
        %v264 = vld [vmem:[%s212] sm:$0xff]
        %v265 = vld [vmem:[%s222] sm:$0xff]
        %v266 = vmul.f32 %v265, 100.0
        %v267 = vsub.f32 %v266, %v264
        %v268 = vmul.f32 %v267, %v267
        %v269 = vld [vmem:[%s248] sm:$0xff]
        %v270 = vadd.f32 %v268, 0.0
        %v271 = vadd.f32 %v269, %v270
        %272 = vst [vmem:[%s248] sm:$0xff] %v271
        %vm273 = vcmp.gt.f32.partialorder %v265, 0.5
        %vm274 = vcmp.gt.f32.partialorder %v264, 0.5
        %vm275 = vmxor %vm273, %vm274
        %vm276 = vmxor %vm275, 1
        %v277 = vsel %vm276, 1, 0
        %v278 = vcvt.s32.f32 %v277
        %v279 = vld [vmem:[%s255] sm:$0xff]
        %v280 = vadd.f32 %v278, 0.0
        %v281 = vadd.f32 %v279, %v280
        %282 = vst [vmem:[%s255] sm:$0xff] %v281
        %s283 = sand.u32 %s103, 1
        %s284 = scalar_lea.sflag [#allocation4], %s283
        %s285 = sand.u32 %s103, 1
        %s286 = smul.addr %s285, 8
        %s287 = scalar_lea.vmem [#allocation7], %s286
        %s288 = sand.u32 %s129, 1
        %s289 = scalar_lea.sflag [#allocation9], %s288
        %s290 = sand.u32 %s129, 1
        %s291 = smul.addr %s290, 8
        %s292 = scalar_lea.vmem [#allocation8], %s291
        // Predicated region
        $region41: #{tpu_custom_call.1} parent=27 // pred_check
          %p293 = pneg %p113
        $region42: #{tpu_custom_call.1} parent=27 // pred_check_branch
          %295 = sbr.rel (%p293) target = $region44
        $region43: #{tpu_custom_call.1} parent=27 // pred_region
          %297 = vsyncadd %s284, 0
          %s298 = smul.addr %s31, 8
          %s299 = scalar_lea.hbm %s2, %s298
          %s301 = sshll.u32 %s287, 4
          %s302 = int_to_ptr.vmem [resolvable:$true] %s301
          %s303 = sshll.u32 %s299, 4
          %s304 = int_to_ptr.hbm [resolvable:$true] %s303
          %306 = dma.vmem_to_hbm [thread:$0]  %s302, 128, %s304, %s284
        $region44: #{tpu_custom_call.1} parent=27 // pred_fallthru
          _
        // Predicated region
        $region45: #{tpu_custom_call.1} parent=27 // pred_check
          %p307 = pneg %p139
        $region46: #{tpu_custom_call.1} parent=27 // pred_check_branch
          %309 = sbr.rel (%p307) target = $region48
        $region47: #{tpu_custom_call.1} parent=27 // pred_region
          %311 = vsyncadd %s289, 0
          %s312 = smul.addr %s31, 8
          %s313 = scalar_lea.hbm %s3, %s312
          %s315 = sshll.u32 %s292, 4
          %s316 = int_to_ptr.vmem [resolvable:$true] %s315
          %s317 = sshll.u32 %s313, 4
          %s318 = int_to_ptr.hbm [resolvable:$true] %s317
          %320 = dma.vmem_to_hbm [thread:$0]  %s316, 128, %s318, %s289
        $region48: #{tpu_custom_call.1} parent=27 // pred_fallthru
          _
      $region28: #{tpu_custom_call.1} parent=5 // pred_fallthru
        _
      %p321 = scmp.le.s32.totalorder 2, %s22
      // Predicated region
      $region49: #{tpu_custom_call.1} parent=5 // pred_check
        %p322 = pneg %p321
      $region50: #{tpu_custom_call.1} parent=5 // pred_check_branch
        %324 = sbr.rel (%p322) target = $region52
      $region51: #{tpu_custom_call.1} parent=5 // pred_region
        %s325 = ssub.s32 %s22, 2
        // Predicated region
        $region53: #{tpu_custom_call.1} parent=51 // pred_check
          %p326 = pneg %p119
        $region54: #{tpu_custom_call.1} parent=51 // pred_check_branch
          %328 = sbr.rel (%p326) target = $region56
        $region55: #{tpu_custom_call.1} parent=51 // pred_region
          %s329 = sand.u32 %s104, 1
          %s330 = scalar_lea.sflag [#allocation4], %s329
          %s331 = sand.u32 %s104, 1
          %s332 = smul.addr %s331, 8
          %s333 = scalar_lea.vmem [#allocation7], %s332
          %335 = dma.done %s330, 128
        $region56: #{tpu_custom_call.1} parent=51 // pred_fallthru
          _
        // Predicated region
        $region57: #{tpu_custom_call.1} parent=51 // pred_check
          %p336 = pneg %p145
        $region58: #{tpu_custom_call.1} parent=51 // pred_check_branch
          %338 = sbr.rel (%p336) target = $region60
        $region59: #{tpu_custom_call.1} parent=51 // pred_region
          %s339 = sand.u32 %s130, 1
          %s340 = scalar_lea.sflag [#allocation9], %s339
          %s341 = sand.u32 %s130, 1
          %s342 = smul.addr %s341, 8
          %s343 = scalar_lea.vmem [#allocation8], %s342
          %345 = dma.done %s340, 128
        $region60: #{tpu_custom_call.1} parent=51 // pred_fallthru
          _
      $region52: #{tpu_custom_call.1} parent=5 // pred_fallthru
        _
    $region6: #{tpu_custom_call.1} parent=1 // loop_footer
      %s26 = sadd.s32 1, %s22
    $region7: #{tpu_custom_call.1} parent=1 // loop_footer_branch
      %21 = sbr.rel target = $region3
    $region8: #{tpu_custom_call.1} parent=1 // loop_exit
      _
    %346 = vsyncpa [#allocation3], 1
    %s347 = scalar_lea.sflag [#allocation3], 1
    %348 = vsyncpa %s347, 1
    %349 = vsyncpa [#allocation6], 1
    %s350 = scalar_lea.sflag [#allocation6], 1
    %351 = vsyncpa %s350, 1
    %352 = vsyncpa [#allocation4], 1
    %s353 = scalar_lea.sflag [#allocation4], 1
    %354 = vsyncpa %s353, 1
    %355 = vsyncpa [#allocation9], 1
    %s356 = scalar_lea.sflag [#allocation9], 1
    %357 = vsyncpa %s356, 1

</llo_original>
